<compile_context>
chip_gen: v5e
topology: v5e:2x2
jax: 0.10.0
libtpu: 0.0.40
codegen_flags: <defaults>
</compile_context>

<pallas_src>
import jax
import jax.numpy as jnp
from jax.experimental import pallas as pl
from jax.experimental.pallas import tpu as pltpu

LANES = 128      # vreg lane width (last dim)
TM = 256         # row tile over A_hat; 128 suffices on v5e, 256 feeds 256x256 MXUs


def _round_up(n, m):
    return ((n + m - 1) // m) * m


def _pad2(x, shape):
    """Zero-pad a 2-D array up to `shape` (trailing pad only)."""
    pads = [(0, t - s) for s, t in zip(x.shape, shape)]
    if all(p == (0, 0) for p in pads):
        return x
    return jnp.pad(x, pads)


def _vmem_limit_bytes():
    """~75% of physical VMEM (headroom for double buffers / Mosaic scratch)."""
    cap = 64 * 1024 * 1024
    try:
        info = pltpu.get_tpu_info()
        cap = getattr(info, "vmem_capacity_bytes", cap) or cap
    except Exception:
        pass
    return int(cap * 3 // 4)


# ---------------------------------------------------------------------------
# Kernel 1: h_tile = relu(A_hat[tile, :] @ XW1 + b1)
#   a_ref  : (TM, N_p)  bf16   -- row tile of A_hat
#   xw1_ref: (N_p, H_p) bf16   -- resident
#   b1_ref : (1, H_p)   f32    -- resident
# ---------------------------------------------------------------------------
def _conv1_relu_kernel(a_ref, xw1_ref, b1_ref, h_ref):
    acc = jnp.dot(a_ref[...], xw1_ref[...], preferred_element_type=jnp.float32)
    h_ref[...] = jnp.maximum(acc + b1_ref[...], 0.0).astype(h_ref.dtype)


# ---------------------------------------------------------------------------
# Kernel 2: logits_tile = A_hat[tile, :] @ (h @ W2) + b2 ; row-wise log_softmax
#   b2 arrives with -1e30 in padded class lanes (mask baked in; f32 epilogue).
# ---------------------------------------------------------------------------
def _conv2_logsoftmax_kernel(a_ref, hw2_ref, b2_ref, o_ref):
    logits = jnp.dot(a_ref[...], hw2_ref[...], preferred_element_type=jnp.float32)
    logits = logits + b2_ref[...]
    m = jnp.max(logits, axis=-1, keepdims=True)
    s = logits - m
    lse = jnp.log(jnp.sum(jnp.exp(s), axis=-1, keepdims=True))
    o_ref[...] = (s - lse).astype(o_ref.dtype)


@jax.jit
def gcn_forward(x, a_hat, w1, b1, w2, b2):
    n, _ = x.shape
    hidden = w1.shape[1]
    classes = w2.shape[1]

    tm = min(TM, _round_up(n, LANES))      # don't over-pad tiny graphs
    n_p = _round_up(n, tm)                 # N is the MXU contraction dim
    h_p = _round_up(hidden, LANES)
    c_p = _round_up(classes, LANES)

    # Hoisted out of the kernel: XW1 in f32 by XLA, then bf16 for the MXU.
    xw1 = jnp.dot(x, w1, preferred_element_type=jnp.float32)

    a_p = _pad2(a_hat, (n_p, n_p)).astype(jnp.bfloat16)   # dominant DMA in bf16
    xw1_p = _pad2(xw1, (n_p, h_p)).astype(jnp.bfloat16)
    b1_p = _pad2(b1.reshape(1, -1), (1, h_p))
    w2_p = _pad2(w2, (h_p, c_p))
    # Padded W2 columns are zero, so padded logits equal b2_pad exactly; a
    # -1e30 sentinel removes them from log_softmax. Keep the epilogue in f32
    # (the sentinel would overflow to -inf in bf16).
    b2_p = jnp.full((1, c_p), -1e30, jnp.float32).at[0, :classes].set(b2)

    grid = (n_p // tm,)
    vmem_limit = _vmem_limit_bytes()
    cparams = pltpu.CompilerParams(
        dimension_semantics=("parallel",),
        vmem_limit_bytes=vmem_limit,
    )

    # --- Pass 1: h = relu(A_hat @ XW1 + b1), row-tiled over A_hat -----------
    h = pl.pallas_call(
        _conv1_relu_kernel,
        out_shape=jax.ShapeDtypeStruct((n_p, h_p), jnp.bfloat16),
        grid=grid,
        in_specs=[
            pl.BlockSpec((tm, n_p), lambda i: (i, 0)),     # A_hat row tile
            pl.BlockSpec((n_p, h_p), lambda i: (0, 0)),    # XW1 resident
            pl.BlockSpec((1, h_p), lambda i: (0, 0)),      # b1 resident
        ],
        out_specs=pl.BlockSpec((tm, h_p), lambda i: (i, 0)),
        compiler_params=cparams,
        cost_estimate=pl.CostEstimate(
            flops=2 * n_p * n_p * h_p,
            transcendentals=0,
            bytes_accessed=(n_p * n_p * 2 + n_p * h_p * 2 + h_p * 4
                            + n_p * h_p * 2),
        ),
    )(a_p, xw1_p, b1_p)

    # F.dropout(training=False) == identity (eval mode).

    # Small inner product h @ W2 done by XLA; kernels only ever stream A_hat.
    hw2 = jnp.dot(h, w2_p.astype(jnp.bfloat16),
                  preferred_element_type=jnp.float32).astype(jnp.bfloat16)

    # --- Pass 2: logits = A_hat @ (h @ W2) + b2 ; log_softmax ----------------
    out_p = pl.pallas_call(
        _conv2_logsoftmax_kernel,
        out_shape=jax.ShapeDtypeStruct((n_p, c_p), jnp.float32),
        grid=grid,
        in_specs=[
            pl.BlockSpec((tm, n_p), lambda i: (i, 0)),     # A_hat row tile
            pl.BlockSpec((n_p, c_p), lambda i: (0, 0)),    # hW2 resident
            pl.BlockSpec((1, c_p), lambda i: (0, 0)),      # b2 (+mask) resident
        ],
        out_specs=pl.BlockSpec((tm, c_p), lambda i: (i, 0)),
        compiler_params=cparams,
        cost_estimate=pl.CostEstimate(
            flops=2 * n_p * n_p * c_p,
            transcendentals=n_p * c_p,
            bytes_accessed=(n_p * n_p * 2 + n_p * c_p * 2 + c_p * 4
                            + n_p * c_p * 4),
        ),
    )(a_p, hw2, b2_p)

    return out_p[:n, :classes]


# ---------------------------------------------------------------------------
# Glue: normalized adjacency + parameters (outside the hot path)
# ---------------------------------------------------------------------------
def build_normalized_adjacency(edge_index, num_nodes):
    """Dense A_hat = D^{-1/2} (A with unit diagonal) D^{-1/2} from (2, E)."""
    src, dst = edge_index[0], edge_index[1]
    a = jnp.zeros((num_nodes, num_nodes), jnp.float32)
    a = a.at[src, dst].set(1.0)
    a = a.at[dst, src].set(1.0)                 # symmetrize (Cora is undirected)
    diag = jnp.arange(num_nodes)
    a = a.at[diag, diag].set(1.0)               # self loops: set (not add) diag=1
    deg = jnp.sum(a, axis=1)
    d_inv_sqrt = jnp.where(deg > 0, 1.0 / jnp.sqrt(deg), 0.0)
    return a * d_inv_sqrt[:, None] * d_inv_sqrt[None, :]


def init_params(key, num_features, hidden_channels, num_classes):
    k1, k2 = jax.random.split(key)
    # Glorot-style init for W (as in GCNConv), zeros for b.
    w1 = jax.random.normal(k1, (num_features, hidden_channels), jnp.float32)
    w1 = w1 * jnp.sqrt(2.0 / (num_features + hidden_channels))
    w2 = jax.random.normal(k2, (hidden_channels, num_classes), jnp.float32)
    w2 = w2 * jnp.sqrt(2.0 / (hidden_channels + num_classes))
    b1 = jnp.zeros((hidden_channels,), jnp.float32)
    b2 = jnp.zeros((num_classes,), jnp.float32)
    return w1, b1, w2, b2


def gcn_reference(x, a_hat, w1, b1, w2, b2):
    """Pure-JAX f32 reference of the same forward pass."""
    h = jnp.maximum(a_hat @ (x @ w1) + b1, 0.0)
    logits = a_hat @ (h @ w2) + b2
    return jax.nn.log_softmax(logits, axis=1)


# ---------------------------------------------------------------------------
if __name__ == "__main__":
    key = jax.random.PRNGKey(0)
    k_x, k_e, k_p = jax.random.split(key, 3)

    num_nodes = 32
    num_features = 16
    hidden_channels = 32
    num_classes = 8
    num_edges = 64

    # Synthetic node features + random edge_index (2, E), like data.x / data.edge_index.
    x = jax.random.normal(k_x, (num_nodes, num_features), jnp.float32)
    edge_index = jax.random.randint(k_e, (2, num_edges), 0, num_nodes, jnp.int32)

    a_hat = build_normalized_adjacency(edge_index, num_nodes)
    w1, b1, w2, b2 = init_params(k_p, num_features, hidden_channels, num_classes)

    out = gcn_forward(x, a_hat, w1, b1, w2, b2)
    jax.block_until_ready(out)

    assert out.shape == (num_nodes, num_classes)
    # log_softmax rows should sum (in prob space) to ~1.
    assert jnp.allclose(jnp.sum(jnp.exp(out), axis=1), 1.0, atol=1e-3)
    # Match the pure-JAX f32 reference (bf16 MXU inputs => loose tolerance).
    ref = gcn_reference(x, a_hat, w1, b1, w2, b2)
    assert jnp.max(jnp.abs(out - ref)) < 0.1, float(jnp.max(jnp.abs(out - ref)))
    print("KERNEL_OK")
</pallas_src>

<mosaic_0001>
module attributes {stable_mosaic.version = 11 : i64} {
  func.func @_conv1_relu_kernel(%arg0: i32, %arg1: memref<128x128xbf16, #tpu.memory_space<vmem>>, %arg2: memref<128x128xbf16, #tpu.memory_space<vmem>>, %arg3: memref<1x128xf32, #tpu.memory_space<vmem>>, %arg4: memref<128x128xbf16, #tpu.memory_space<vmem>>) attributes {dimension_semantics = [#tpu.dimension_semantics<parallel>], iteration_bounds = array<i64: 1>, scalar_prefetch = 0 : i64, scratch_operands = 0 : i64, tpu.core_type = #tpu.core_type<tc>, window_params = [{transform_indices = @transform_0, window_bounds = array<i64: 128, 128>}, {pipeline_mode = #tpu.pipeline_mode<synchronous>, transform_indices = @transform_1, window_bounds = array<i64: 128, 128>}, {pipeline_mode = #tpu.pipeline_mode<synchronous>, transform_indices = @transform_2, window_bounds = array<i64: 1, 128>}, {transform_indices = @transform_3, window_bounds = array<i64: 128, 128>}]} {
    %c0 = arith.constant 0 : index
    %c0_0 = arith.constant 0 : index
    %0 = vector.load %arg1[%c0, %c0_0] : memref<128x128xbf16, #tpu.memory_space<vmem>>, vector<128x128xbf16>
    %c0_1 = arith.constant 0 : index
    %c0_2 = arith.constant 0 : index
    %1 = vector.load %arg2[%c0_1, %c0_2] : memref<128x128xbf16, #tpu.memory_space<vmem>>, vector<128x128xbf16>
    %cst = arith.constant dense<0.000000e+00> : vector<128x128xf32>
    %2 = tpu.matmul %0, %1, %cst {dimension_numbers = #tpu.dot_dimension_numbers<[1], [0], [0], [1], [0, 0, 1, 1], [], []>} : vector<128x128xbf16>, vector<128x128xbf16>, vector<128x128xf32> -> vector<128x128xf32>
    %c0_3 = arith.constant 0 : index
    %c0_4 = arith.constant 0 : index
    %3 = vector.load %arg3[%c0_3, %c0_4] : memref<1x128xf32, #tpu.memory_space<vmem>>, vector<1x128xf32>
    %4 = vector.broadcast %3 : vector<1x128xf32> to vector<128x128xf32>
    %5 = arith.addf %2, %4 : vector<128x128xf32>
    %cst_5 = arith.constant 0.000000e+00 : f32
    %6 = vector.broadcast %cst_5 : f32 to vector<128x128xf32>
    %7 = arith.maximumf %5, %6 : vector<128x128xf32>
    %8 = arith.truncf %7 : vector<128x128xf32> to vector<128x128xbf16>
    %c0_6 = arith.constant 0 : index
    %c0_7 = arith.constant 0 : index
    %9 = vector.load %arg4[%c0_6, %c0_7] : memref<128x128xbf16, #tpu.memory_space<vmem>>, vector<128x128xbf16>
    tpu.vector_store %arg4[%c0_6, %c0_7], %8 {strides = array<i32>} : memref<128x128xbf16, #tpu.memory_space<vmem>>, vector<128x128xbf16>,
    return
  }
  func.func @transform_0(%arg0: i32) -> (i32, i32) {
    %c0_i32 = arith.constant 0 : i32
    %c0_i32_0 = arith.constant 0 : i32
    return %arg0, %c0_i32 : i32, i32
  }
  func.func @transform_1(%arg0: i32) -> (i32, i32) {
    %c0_i32 = arith.constant 0 : i32
    %c0_i32_0 = arith.constant 0 : i32
    %c0_i32_1 = arith.constant 0 : i32
    return %c0_i32, %c0_i32_0 : i32, i32
  }
  func.func @transform_2(%arg0: i32) -> (i32, i32) {
    %c0_i32 = arith.constant 0 : i32
    %c0_i32_0 = arith.constant 0 : i32
    %c0_i32_1 = arith.constant 0 : i32
    return %c0_i32, %c0_i32_0 : i32, i32
  }
  func.func @transform_3(%arg0: i32) -> (i32, i32) {
    %c0_i32 = arith.constant 0 : i32
    %c0_i32_0 = arith.constant 0 : i32
    return %arg0, %c0_i32 : i32, i32
  }
}

module attributes {stable_mosaic.version = 11 : i64} {
  func.func @_conv2_logsoftmax_kernel(%arg0: i32, %arg1: memref<128x128xbf16, #tpu.memory_space<vmem>>, %arg2: memref<128x128xbf16, #tpu.memory_space<vmem>>, %arg3: memref<1x128xf32, #tpu.memory_space<vmem>>, %arg4: memref<128x128xf32, #tpu.memory_space<vmem>>) attributes {dimension_semantics = [#tpu.dimension_semantics<parallel>], iteration_bounds = array<i64: 1>, scalar_prefetch = 0 : i64, scratch_operands = 0 : i64, tpu.core_type = #tpu.core_type<tc>, window_params = [{transform_indices = @transform_0, window_bounds = array<i64: 128, 128>}, {pipeline_mode = #tpu.pipeline_mode<synchronous>, transform_indices = @transform_1, window_bounds = array<i64: 128, 128>}, {pipeline_mode = #tpu.pipeline_mode<synchronous>, transform_indices = @transform_2, window_bounds = array<i64: 1, 128>}, {transform_indices = @transform_3, window_bounds = array<i64: 128, 128>}]} {
    %c0 = arith.constant 0 : index
    %c0_0 = arith.constant 0 : index
    %0 = vector.load %arg1[%c0, %c0_0] : memref<128x128xbf16, #tpu.memory_space<vmem>>, vector<128x128xbf16>
    %c0_1 = arith.constant 0 : index
    %c0_2 = arith.constant 0 : index
    %1 = vector.load %arg2[%c0_1, %c0_2] : memref<128x128xbf16, #tpu.memory_space<vmem>>, vector<128x128xbf16>
    %cst = arith.constant dense<0.000000e+00> : vector<128x128xf32>
    %2 = tpu.matmul %0, %1, %cst {dimension_numbers = #tpu.dot_dimension_numbers<[1], [0], [0], [1], [0, 0, 1, 1], [], []>} : vector<128x128xbf16>, vector<128x128xbf16>, vector<128x128xf32> -> vector<128x128xf32>
    %c0_3 = arith.constant 0 : index
    %c0_4 = arith.constant 0 : index
    %3 = vector.load %arg3[%c0_3, %c0_4] : memref<1x128xf32, #tpu.memory_space<vmem>>, vector<1x128xf32>
    %4 = vector.broadcast %3 : vector<1x128xf32> to vector<128x128xf32>
    %5 = arith.addf %2, %4 : vector<128x128xf32>
    %cst_5 = arith.constant dense<0xFF800000> : vector<128xf32>
    %6 = vector.multi_reduction <maximumf>, %5, %cst_5 [1] : vector<128x128xf32> to vector<128xf32>
    %7 = vector.shape_cast %6 : vector<128xf32> to vector<128x1xf32>
    %8 = vector.broadcast %7 : vector<128x1xf32> to vector<128x128xf32>
    %9 = arith.subf %5, %8 : vector<128x128xf32>
    %10 = math.exp %9 : vector<128x128xf32>
    %cst_6 = arith.constant dense<0.000000e+00> : vector<128xf32>
    %11 = vector.multi_reduction <add>, %10, %cst_6 [1] : vector<128x128xf32> to vector<128xf32>
    %12 = vector.shape_cast %11 : vector<128xf32> to vector<128x1xf32>
    %13 = math.log %12 : vector<128x1xf32>
    %14 = vector.broadcast %13 : vector<128x1xf32> to vector<128x128xf32>
    %15 = arith.subf %9, %14 : vector<128x128xf32>
    %c0_7 = arith.constant 0 : index
    %c0_8 = arith.constant 0 : index
    %16 = vector.load %arg4[%c0_7, %c0_8] : memref<128x128xf32, #tpu.memory_space<vmem>>, vector<128x128xf32>
    tpu.vector_store %arg4[%c0_7, %c0_8], %15 {strides = array<i32>} : memref<128x128xf32, #tpu.memory_space<vmem>>, vector<128x128xf32>,
    return
  }
  func.func @transform_0(%arg0: i32) -> (i32, i32) {
    %c0_i32 = arith.constant 0 : i32
    %c0_i32_0 = arith.constant 0 : i32
    return %arg0, %c0_i32 : i32, i32
  }
  func.func @transform_1(%arg0: i32) -> (i32, i32) {
    %c0_i32 = arith.constant 0 : i32
    %c0_i32_0 = arith.constant 0 : i32
    %c0_i32_1 = arith.constant 0 : i32
    return %c0_i32, %c0_i32_0 : i32, i32
  }
  func.func @transform_2(%arg0: i32) -> (i32, i32) {
    %c0_i32 = arith.constant 0 : i32
    %c0_i32_0 = arith.constant 0 : i32
    %c0_i32_1 = arith.constant 0 : i32
    return %c0_i32, %c0_i32_0 : i32, i32
  }
  func.func @transform_3(%arg0: i32) -> (i32, i32) {
    %c0_i32 = arith.constant 0 : i32
    %c0_i32_0 = arith.constant 0 : i32
    return %arg0, %c0_i32 : i32, i32
  }
}

</mosaic_0001>

<llo_original>
// kernel: gcn_forward.2
$region0: #{gcn_forward.2}
  #allocation0 [shape = 'u32[]', space=smem, size = 0x4, offset = 0x4, fixed_abs, tag = 'smem constant byte address 0x4 - core index']
  #allocation1 [shape = 'u32[72,128]{1,0:T(1,128)}', space=vmem, size = 0x9000, scoped, tag = 'internal scratch']
  %s0 = inlined_call_operand.vmem [shape: bf16[128,128], index: 0, kind: input, shape index: {}]
  %s1 = inlined_call_operand.vmem [shape: bf16[128,128], index: 1, kind: input, shape index: {}]
  %s2 = inlined_call_operand.vmem [shape: f32[1,128], index: 2, kind: input, shape index: {}]
  %s3 = inlined_call_operand.vmem [shape: bf16[128,128], index: 3, kind: output, shape index: {}]
  %s4 = sld [smem:[#allocation0]]
  $region22: #{gcn_forward.2} parent=0
    _
  %s6 = ssub.s32 1, %s4
  %s7 = scalar_select 0, %s6, %s4
  // Predicated region
  $region2: #{gcn_forward.2} parent=0 // pred_check
    _
  $region3: #{gcn_forward.2} parent=0 // pred_check_branch
    %9 = sbr.rel (0) target = $region5
  $region4: #{gcn_forward.2} parent=0 // pred_region
    _
  $region5: #{gcn_forward.2} parent=0 // pred_fallthru
    _
  // Predicated region
  $region6: #{gcn_forward.2} parent=0 // pred_check
    _
  $region7: #{gcn_forward.2} parent=0 // pred_check_branch
    %11 = sbr.rel (0) target = $region9
  $region8: #{gcn_forward.2} parent=0 // pred_region
    _
  $region9: #{gcn_forward.2} parent=0 // pred_fallthru
    _
  // Predicated region
  $region10: #{gcn_forward.2} parent=0 // pred_check
    _
  $region11: #{gcn_forward.2} parent=0 // pred_check_branch
    %13 = sbr.rel (0) target = $region13
  $region12: #{gcn_forward.2} parent=0 // pred_region
    _
  $region13: #{gcn_forward.2} parent=0 // pred_fallthru
    _
  %v14 = vld [vmem:[%s0] sm:$0xf]
  %v15 = vld [vmem:[%s0 + $0x4] sm:$0xf]
  %v16 = vld [vmem:[%s0 + $0x8] sm:$0xf]
  %v17 = vld [vmem:[%s0 + $0xc] sm:$0xf]
  %v18 = vld [vmem:[%s0 + $0x10] sm:$0xf]
  %v19 = vld [vmem:[%s0 + $0x14] sm:$0xf]
  %v20 = vld [vmem:[%s0 + $0x18] sm:$0xf]
  %v21 = vld [vmem:[%s0 + $0x1c] sm:$0xf]
  %v22 = vld [vmem:[%s0 + $0x20] sm:$0xf]
  %v23 = vld [vmem:[%s0 + $0x24] sm:$0xf]
  %v24 = vld [vmem:[%s0 + $0x28] sm:$0xf]
  %v25 = vld [vmem:[%s0 + $0x2c] sm:$0xf]
  %v26 = vld [vmem:[%s0 + $0x30] sm:$0xf]
  %v27 = vld [vmem:[%s0 + $0x34] sm:$0xf]
  %v28 = vld [vmem:[%s0 + $0x38] sm:$0xf]
  %v29 = vld [vmem:[%s0 + $0x3c] sm:$0xf]
  %v30 = vld [vmem:[%s1] sm:$0xf]
  %v31 = vld [vmem:[%s1 + $0x4] sm:$0xf]
  %v32 = vld [vmem:[%s1 + $0x8] sm:$0xf]
  %v33 = vld [vmem:[%s1 + $0xc] sm:$0xf]
  %v34 = vld [vmem:[%s1 + $0x10] sm:$0xf]
  %v35 = vld [vmem:[%s1 + $0x14] sm:$0xf]
  %v36 = vld [vmem:[%s1 + $0x18] sm:$0xf]
  %v37 = vld [vmem:[%s1 + $0x1c] sm:$0xf]
  %v38 = vld [vmem:[%s1 + $0x20] sm:$0xf]
  %v39 = vld [vmem:[%s1 + $0x24] sm:$0xf]
  %v40 = vld [vmem:[%s1 + $0x28] sm:$0xf]
  %v41 = vld [vmem:[%s1 + $0x2c] sm:$0xf]
  %v42 = vld [vmem:[%s1 + $0x30] sm:$0xf]
  %v43 = vld [vmem:[%s1 + $0x34] sm:$0xf]
  %v44 = vld [vmem:[%s1 + $0x38] sm:$0xf]
  %v45 = vld [vmem:[%s1 + $0x3c] sm:$0xf]
  %v46 = vld [vmem:[%s2] sm:$0x1]
  %v48 = vperm.slane %v46, 0
  %v66 = vunpack.c.l.b16 %v14
  %v67 = vunpack.c.l.b16 %v15
  %v68 = vunpack.c.l.b16 %v16
  %v69 = vunpack.c.l.b16 %v17
  %v70 = vunpack.c.l.b16 %v18
  %v71 = vunpack.c.l.b16 %v19
  %v72 = vunpack.c.l.b16 %v20
  %v73 = vunpack.c.l.b16 %v21
  %v74 = vunpack.c.l.b16 %v22
  %v75 = vunpack.c.l.b16 %v23
  %v76 = vunpack.c.l.b16 %v24
  %v77 = vunpack.c.l.b16 %v25
  %v78 = vunpack.c.l.b16 %v26
  %v79 = vunpack.c.l.b16 %v27
  %v80 = vunpack.c.l.b16 %v28
  %v81 = vunpack.c.l.b16 %v29
  %v82 = vpack.c.b16 %v67, %v66
  %v83 = vpack.c.b16 %v69, %v68
  %v84 = vpack.c.b16 %v71, %v70
  %v85 = vpack.c.b16 %v73, %v72
  %v86 = vpack.c.b16 %v75, %v74
  %v87 = vpack.c.b16 %v77, %v76
  %v88 = vpack.c.b16 %v79, %v78
  %v89 = vpack.c.b16 %v81, %v80
  %v114 = vunpack.c.l.b16 %v30
  %v115 = vunpack.c.l.b16 %v31
  %v116 = vunpack.c.l.b16 %v32
  %v117 = vunpack.c.l.b16 %v33
  %v118 = vunpack.c.l.b16 %v34
  %v119 = vunpack.c.l.b16 %v35
  %v120 = vunpack.c.l.b16 %v36
  %v121 = vunpack.c.l.b16 %v37
  %v122 = vunpack.c.l.b16 %v38
  %v123 = vunpack.c.l.b16 %v39
  %v124 = vunpack.c.l.b16 %v40
  %v125 = vunpack.c.l.b16 %v41
  %v126 = vunpack.c.l.b16 %v42
  %v127 = vunpack.c.l.b16 %v43
  %v128 = vunpack.c.l.b16 %v44
  %v129 = vunpack.c.l.b16 %v45
  %v130 = vpack.c.b16 %v115, %v114
  %v131 = vpack.c.b16 %v117, %v116
  %v132 = vpack.c.b16 %v119, %v118
  %v133 = vpack.c.b16 %v121, %v120
  %v134 = vpack.c.b16 %v123, %v122
  %v135 = vpack.c.b16 %v125, %v124
  %v136 = vpack.c.b16 %v127, %v126
  %v137 = vpack.c.b16 %v129, %v128
  %146 = vmatpush.bf16.msra.mxu0 %v137
  %147 = vmatpush.bf16.msra.mxu0 %v136
  %148 = vmatpush.bf16.msra.mxu0 %v135
  %149 = vmatpush.bf16.msra.mxu0 %v134
  %150 = vmatpush.bf16.msra.mxu0 %v133
  %151 = vmatpush.bf16.msra.mxu0 %v132
  %152 = vmatpush.bf16.msra.mxu0 %v131
  %153 = vmatpush.bf16.msra.mxu0 %v130
  %154 = vmatmul.bf16.gmra.mxu0 %v82
  %v155 = vpop.f32.mrf.mxu0
  %v156 = vadd.f32 %v48, %v155
  %v157 = vpop.f32.mrf.mxu0
  %v158 = vadd.f32 %v48, %v157
  %159 = vmatmul.bf16.gmra.mxu0 %v83
  %v160 = vpop.f32.mrf.mxu0
  %v161 = vadd.f32 %v48, %v160
  %v162 = vpop.f32.mrf.mxu0
  %v163 = vadd.f32 %v48, %v162
  %164 = vmatmul.bf16.gmra.mxu0 %v84
  %v165 = vpop.f32.mrf.mxu0
  %v166 = vadd.f32 %v48, %v165
  %v167 = vpop.f32.mrf.mxu0
  %v168 = vadd.f32 %v48, %v167
  %169 = vmatmul.bf16.gmra.mxu0 %v85
  %v170 = vpop.f32.mrf.mxu0
  %v171 = vadd.f32 %v48, %v170
  %v172 = vpop.f32.mrf.mxu0
  %v173 = vadd.f32 %v48, %v172
  %174 = vmatmul.bf16.gmra.mxu0 %v86
  %v175 = vpop.f32.mrf.mxu0
  %v176 = vadd.f32 %v48, %v175
  %v177 = vpop.f32.mrf.mxu0
  %v178 = vadd.f32 %v48, %v177
  %179 = vmatmul.bf16.gmra.mxu0 %v87
  %v180 = vpop.f32.mrf.mxu0
  %v181 = vadd.f32 %v48, %v180
  %v182 = vpop.f32.mrf.mxu0
  %v183 = vadd.f32 %v48, %v182
  %184 = vmatmul.bf16.gmra.mxu0 %v88
  %v185 = vpop.f32.mrf.mxu0
  %v186 = vadd.f32 %v48, %v185
  %v187 = vpop.f32.mrf.mxu0
  %v188 = vadd.f32 %v48, %v187
  %189 = vmatmul.bf16.gmra.mxu0 %v89
  %v190 = vpop.f32.mrf.mxu0
  %v191 = vadd.f32 %v48, %v190
  %v192 = vpop.f32.mrf.mxu0
  %v193 = vadd.f32 %v48, %v192
  %194 = vdwg.mxu0
  %v195 = vmax.f32 %v156, 0.0
  %v196 = vmax.f32 %v158, 0.0
  %v197 = vmax.f32 %v161, 0.0
  %v198 = vmax.f32 %v163, 0.0
  %v199 = vmax.f32 %v166, 0.0
  %v200 = vmax.f32 %v168, 0.0
  %v201 = vmax.f32 %v171, 0.0
  %v202 = vmax.f32 %v173, 0.0
  %v203 = vmax.f32 %v176, 0.0
  %v204 = vmax.f32 %v178, 0.0
  %v205 = vmax.f32 %v181, 0.0
  %v206 = vmax.f32 %v183, 0.0
  %v207 = vmax.f32 %v186, 0.0
  %v208 = vmax.f32 %v188, 0.0
  %v209 = vmax.f32 %v191, 0.0
  %v210 = vmax.f32 %v193, 0.0
  %v211 = vpack.c.bf16 %v195, %v195
  %v212 = vpack.c.bf16 %v196, %v196
  %v213 = vpack.c.bf16 %v197, %v197
  %v214 = vpack.c.bf16 %v198, %v198
  %v215 = vpack.c.bf16 %v199, %v199
  %v216 = vpack.c.bf16 %v200, %v200
  %v217 = vpack.c.bf16 %v201, %v201
  %v218 = vpack.c.bf16 %v202, %v202
  %v219 = vpack.c.bf16 %v203, %v203
  %v220 = vpack.c.bf16 %v204, %v204
  %v221 = vpack.c.bf16 %v205, %v205
  %v222 = vpack.c.bf16 %v206, %v206
  %v223 = vpack.c.bf16 %v207, %v207
  %v224 = vpack.c.bf16 %v208, %v208
  %v225 = vpack.c.bf16 %v209, %v209
  %v226 = vpack.c.bf16 %v210, %v210
  %227 = vst [vmem:[%s3] sm:$0xf] %v211
  %228 = vst [vmem:[%s3 + $0x4] sm:$0xf] %v212
  %229 = vst [vmem:[%s3 + $0x8] sm:$0xf] %v213
  %230 = vst [vmem:[%s3 + $0xc] sm:$0xf] %v214
  %231 = vst [vmem:[%s3 + $0x10] sm:$0xf] %v215
  %232 = vst [vmem:[%s3 + $0x14] sm:$0xf] %v216
  %233 = vst [vmem:[%s3 + $0x18] sm:$0xf] %v217
  %234 = vst [vmem:[%s3 + $0x1c] sm:$0xf] %v218
  %235 = vst [vmem:[%s3 + $0x20] sm:$0xf] %v219
  %236 = vst [vmem:[%s3 + $0x24] sm:$0xf] %v220
  %237 = vst [vmem:[%s3 + $0x28] sm:$0xf] %v221
  %238 = vst [vmem:[%s3 + $0x2c] sm:$0xf] %v222
  %239 = vst [vmem:[%s3 + $0x30] sm:$0xf] %v223
  %240 = vst [vmem:[%s3 + $0x34] sm:$0xf] %v224
  %241 = vst [vmem:[%s3 + $0x38] sm:$0xf] %v225
  %242 = vst [vmem:[%s3 + $0x3c] sm:$0xf] %v226
  // Predicated region
  $region14: #{gcn_forward.2} parent=0 // pred_check
    _
  $region15: #{gcn_forward.2} parent=0 // pred_check_branch
    %244 = sbr.rel (0) target = $region17
  $region16: #{gcn_forward.2} parent=0 // pred_region
    _
  $region17: #{gcn_forward.2} parent=0 // pred_fallthru
    _
  // Predicated region
  $region18: #{gcn_forward.2} parent=0 // pred_check
    _
  $region19: #{gcn_forward.2} parent=0 // pred_check_branch
    %246 = sbr.rel (0) target = $region21
  $region20: #{gcn_forward.2} parent=0 // pred_region
    _
  $region21: #{gcn_forward.2} parent=0 // pred_fallthru
    _

// kernel: gcn_forward.3
$region0: #{gcn_forward.3}
  #allocation0 [shape = 'u32[]', space=smem, size = 0x4, offset = 0x4, fixed_abs, tag = 'smem constant byte address 0x4 - core index']
  #allocation1 [shape = 'u32[72,128]{1,0:T(1,128)}', space=vmem, size = 0x9000, scoped, tag = 'internal scratch']
  %s0 = inlined_call_operand.vmem [shape: bf16[128,128], index: 0, kind: input, shape index: {}]
  %s1 = inlined_call_operand.vmem [shape: bf16[128,128], index: 1, kind: input, shape index: {}]
  %s2 = inlined_call_operand.vmem [shape: f32[1,128], index: 2, kind: input, shape index: {}]
  %s3 = inlined_call_operand.vmem [shape: f32[128,128], index: 3, kind: output, shape index: {}]
  %s4 = sld [smem:[#allocation0]]
  $region22: #{gcn_forward.3} parent=0
    _
  %s6 = ssub.s32 1, %s4
  %s7 = scalar_select 0, %s6, %s4
  // Predicated region
  $region2: #{gcn_forward.3} parent=0 // pred_check
    _
  $region3: #{gcn_forward.3} parent=0 // pred_check_branch
    %9 = sbr.rel (0) target = $region5
  $region4: #{gcn_forward.3} parent=0 // pred_region
    _
  $region5: #{gcn_forward.3} parent=0 // pred_fallthru
    _
  // Predicated region
  $region6: #{gcn_forward.3} parent=0 // pred_check
    _
  $region7: #{gcn_forward.3} parent=0 // pred_check_branch
    %11 = sbr.rel (0) target = $region9
  $region8: #{gcn_forward.3} parent=0 // pred_region
    _
  $region9: #{gcn_forward.3} parent=0 // pred_fallthru
    _
  // Predicated region
  $region10: #{gcn_forward.3} parent=0 // pred_check
    _
  $region11: #{gcn_forward.3} parent=0 // pred_check_branch
    %13 = sbr.rel (0) target = $region13
  $region12: #{gcn_forward.3} parent=0 // pred_region
    _
  $region13: #{gcn_forward.3} parent=0 // pred_fallthru
    _
  %v14 = vld [vmem:[%s0] sm:$0xf]
  %v15 = vld [vmem:[%s0 + $0x4] sm:$0xf]
  %v16 = vld [vmem:[%s0 + $0x8] sm:$0xf]
  %v17 = vld [vmem:[%s0 + $0xc] sm:$0xf]
  %v18 = vld [vmem:[%s0 + $0x10] sm:$0xf]
  %v19 = vld [vmem:[%s0 + $0x14] sm:$0xf]
  %v20 = vld [vmem:[%s0 + $0x18] sm:$0xf]
  %v21 = vld [vmem:[%s0 + $0x1c] sm:$0xf]
  %v22 = vld [vmem:[%s0 + $0x20] sm:$0xf]
  %v23 = vld [vmem:[%s0 + $0x24] sm:$0xf]
  %v24 = vld [vmem:[%s0 + $0x28] sm:$0xf]
  %v25 = vld [vmem:[%s0 + $0x2c] sm:$0xf]
  %v26 = vld [vmem:[%s0 + $0x30] sm:$0xf]
  %v27 = vld [vmem:[%s0 + $0x34] sm:$0xf]
  %v28 = vld [vmem:[%s0 + $0x38] sm:$0xf]
  %v29 = vld [vmem:[%s0 + $0x3c] sm:$0xf]
  %v30 = vld [vmem:[%s1] sm:$0xf]
  %v31 = vld [vmem:[%s1 + $0x4] sm:$0xf]
  %v32 = vld [vmem:[%s1 + $0x8] sm:$0xf]
  %v33 = vld [vmem:[%s1 + $0xc] sm:$0xf]
  %v34 = vld [vmem:[%s1 + $0x10] sm:$0xf]
  %v35 = vld [vmem:[%s1 + $0x14] sm:$0xf]
  %v36 = vld [vmem:[%s1 + $0x18] sm:$0xf]
  %v37 = vld [vmem:[%s1 + $0x1c] sm:$0xf]
  %v38 = vld [vmem:[%s1 + $0x20] sm:$0xf]
  %v39 = vld [vmem:[%s1 + $0x24] sm:$0xf]
  %v40 = vld [vmem:[%s1 + $0x28] sm:$0xf]
  %v41 = vld [vmem:[%s1 + $0x2c] sm:$0xf]
  %v42 = vld [vmem:[%s1 + $0x30] sm:$0xf]
  %v43 = vld [vmem:[%s1 + $0x34] sm:$0xf]
  %v44 = vld [vmem:[%s1 + $0x38] sm:$0xf]
  %v45 = vld [vmem:[%s1 + $0x3c] sm:$0xf]
  %v46 = vld [vmem:[%s2] sm:$0x1]
  %v48 = vperm.slane %v46, 0
  %v66 = vunpack.c.l.b16 %v14
  %v67 = vunpack.c.l.b16 %v15
  %v68 = vunpack.c.l.b16 %v16
  %v69 = vunpack.c.l.b16 %v17
  %v70 = vunpack.c.l.b16 %v18
  %v71 = vunpack.c.l.b16 %v19
  %v72 = vunpack.c.l.b16 %v20
  %v73 = vunpack.c.l.b16 %v21
  %v74 = vunpack.c.l.b16 %v22
  %v75 = vunpack.c.l.b16 %v23
  %v76 = vunpack.c.l.b16 %v24
  %v77 = vunpack.c.l.b16 %v25
  %v78 = vunpack.c.l.b16 %v26
  %v79 = vunpack.c.l.b16 %v27
  %v80 = vunpack.c.l.b16 %v28
  %v81 = vunpack.c.l.b16 %v29
  %v82 = vpack.c.b16 %v67, %v66
  %v83 = vpack.c.b16 %v69, %v68
  %v84 = vpack.c.b16 %v71, %v70
  %v85 = vpack.c.b16 %v73, %v72
  %v86 = vpack.c.b16 %v75, %v74
  %v87 = vpack.c.b16 %v77, %v76
  %v88 = vpack.c.b16 %v79, %v78
  %v89 = vpack.c.b16 %v81, %v80
  %v114 = vunpack.c.l.b16 %v30
  %v115 = vunpack.c.l.b16 %v31
  %v116 = vunpack.c.l.b16 %v32
  %v117 = vunpack.c.l.b16 %v33
  %v118 = vunpack.c.l.b16 %v34
  %v119 = vunpack.c.l.b16 %v35
  %v120 = vunpack.c.l.b16 %v36
  %v121 = vunpack.c.l.b16 %v37
  %v122 = vunpack.c.l.b16 %v38
  %v123 = vunpack.c.l.b16 %v39
  %v124 = vunpack.c.l.b16 %v40
  %v125 = vunpack.c.l.b16 %v41
  %v126 = vunpack.c.l.b16 %v42
  %v127 = vunpack.c.l.b16 %v43
  %v128 = vunpack.c.l.b16 %v44
  %v129 = vunpack.c.l.b16 %v45
  %v130 = vpack.c.b16 %v115, %v114
  %v131 = vpack.c.b16 %v117, %v116
  %v132 = vpack.c.b16 %v119, %v118
  %v133 = vpack.c.b16 %v121, %v120
  %v134 = vpack.c.b16 %v123, %v122
  %v135 = vpack.c.b16 %v125, %v124
  %v136 = vpack.c.b16 %v127, %v126
  %v137 = vpack.c.b16 %v129, %v128
  %146 = vmatpush.bf16.msra.mxu0 %v137
  %147 = vmatpush.bf16.msra.mxu0 %v136
  %148 = vmatpush.bf16.msra.mxu0 %v135
  %149 = vmatpush.bf16.msra.mxu0 %v134
  %150 = vmatpush.bf16.msra.mxu0 %v133
  %151 = vmatpush.bf16.msra.mxu0 %v132
  %152 = vmatpush.bf16.msra.mxu0 %v131
  %153 = vmatpush.bf16.msra.mxu0 %v130
  %154 = vmatmul.bf16.gmra.mxu0 %v82
  %v155 = vpop.f32.mrf.mxu0
  %v156 = vadd.f32 %v48, %v155
  %v157 = vpop.f32.mrf.mxu0
  %v158 = vadd.f32 %v48, %v157
  %159 = vmatmul.bf16.gmra.mxu0 %v83
  %v160 = vpop.f32.mrf.mxu0
  %v161 = vadd.f32 %v48, %v160
  %v162 = vpop.f32.mrf.mxu0
  %v163 = vadd.f32 %v48, %v162
  %164 = vmatmul.bf16.gmra.mxu0 %v84
  %v165 = vpop.f32.mrf.mxu0
  %v166 = vadd.f32 %v48, %v165
  %v167 = vpop.f32.mrf.mxu0
  %v168 = vadd.f32 %v48, %v167
  %169 = vmatmul.bf16.gmra.mxu0 %v85
  %v170 = vpop.f32.mrf.mxu0
  %v171 = vadd.f32 %v48, %v170
  %v172 = vpop.f32.mrf.mxu0
  %v173 = vadd.f32 %v48, %v172
  %174 = vmatmul.bf16.gmra.mxu0 %v86
  %v175 = vpop.f32.mrf.mxu0
  %v176 = vadd.f32 %v48, %v175
  %v177 = vpop.f32.mrf.mxu0
  %v178 = vadd.f32 %v48, %v177
  %179 = vmatmul.bf16.gmra.mxu0 %v87
  %v180 = vpop.f32.mrf.mxu0
  %v181 = vadd.f32 %v48, %v180
  %v182 = vpop.f32.mrf.mxu0
  %v183 = vadd.f32 %v48, %v182
  %184 = vmatmul.bf16.gmra.mxu0 %v88
  %v185 = vpop.f32.mrf.mxu0
  %v186 = vadd.f32 %v48, %v185
  %v187 = vpop.f32.mrf.mxu0
  %v188 = vadd.f32 %v48, %v187
  %189 = vmatmul.bf16.gmra.mxu0 %v89
  %v190 = vpop.f32.mrf.mxu0
  %v191 = vadd.f32 %v48, %v190
  %v192 = vpop.f32.mrf.mxu0
  %v193 = vadd.f32 %v48, %v192
  %194 = vdwg.mxu0
  %195 = vmax.xlane.f32.xlu0 %v156
  %v196 = vpop.xlane.xlu0 %195
  %197 = vmax.xlane.f32.xlu0 %v158
  %v198 = vpop.xlane.xlu0 %197
  %199 = vmax.xlane.f32.xlu0 %v161
  %v200 = vpop.xlane.xlu0 %199
  %201 = vmax.xlane.f32.xlu0 %v163
  %v202 = vpop.xlane.xlu0 %201
  %203 = vmax.xlane.f32.xlu0 %v166
  %v204 = vpop.xlane.xlu0 %203
  %205 = vmax.xlane.f32.xlu0 %v168
  %v206 = vpop.xlane.xlu0 %205
  %207 = vmax.xlane.f32.xlu0 %v171
  %v208 = vpop.xlane.xlu0 %207
  %209 = vmax.xlane.f32.xlu0 %v173
  %v210 = vpop.xlane.xlu0 %209
  %211 = vmax.xlane.f32.xlu0 %v176
  %v212 = vpop.xlane.xlu0 %211
  %213 = vmax.xlane.f32.xlu0 %v178
  %v214 = vpop.xlane.xlu0 %213
  %215 = vmax.xlane.f32.xlu0 %v181
  %v216 = vpop.xlane.xlu0 %215
  %217 = vmax.xlane.f32.xlu0 %v183
  %v218 = vpop.xlane.xlu0 %217
  %219 = vmax.xlane.f32.xlu0 %v186
  %v220 = vpop.xlane.xlu0 %219
  %221 = vmax.xlane.f32.xlu0 %v188
  %v222 = vpop.xlane.xlu0 %221
  %223 = vmax.xlane.f32.xlu0 %v191
  %v224 = vpop.xlane.xlu0 %223
  %225 = vmax.xlane.f32.xlu0 %v193
  %v226 = vpop.xlane.xlu0 %225
  %v227 = vsub.f32 %v156, %v196
  %v228 = vsub.f32 %v158, %v198
  %v229 = vsub.f32 %v161, %v200
  %v230 = vsub.f32 %v163, %v202
  %v231 = vsub.f32 %v166, %v204
  %v232 = vsub.f32 %v168, %v206
  %v233 = vsub.f32 %v171, %v208
  %v234 = vsub.f32 %v173, %v210
  %v235 = vsub.f32 %v176, %v212
  %v236 = vsub.f32 %v178, %v214
  %v237 = vsub.f32 %v181, %v216
  %v238 = vsub.f32 %v183, %v218
  %v239 = vsub.f32 %v186, %v220
  %v240 = vsub.f32 %v188, %v222
  %v241 = vsub.f32 %v191, %v224
  %v242 = vsub.f32 %v193, %v226
  %v243 = vmul.f32 %v227, 1.442695
  %v244 = vpow.pop %v243
  %v245 = vmul.f32 %v228, 1.442695
  %v246 = vpow.pop %v245
  %v247 = vmul.f32 %v229, 1.442695
  %v248 = vpow.pop %v247
  %v249 = vmul.f32 %v230, 1.442695
  %v250 = vpow.pop %v249
  %v251 = vmul.f32 %v231, 1.442695
  %v252 = vpow.pop %v251
  %v253 = vmul.f32 %v232, 1.442695
  %v254 = vpow.pop %v253
  %v255 = vmul.f32 %v233, 1.442695
  %v256 = vpow.pop %v255
  %v257 = vmul.f32 %v234, 1.442695
  %v258 = vpow.pop %v257
  %v259 = vmul.f32 %v235, 1.442695
  %v260 = vpow.pop %v259
  %v261 = vmul.f32 %v236, 1.442695
  %v262 = vpow.pop %v261
  %v263 = vmul.f32 %v237, 1.442695
  %v264 = vpow.pop %v263
  %v265 = vmul.f32 %v238, 1.442695
  %v266 = vpow.pop %v265
  %v267 = vmul.f32 %v239, 1.442695
  %v268 = vpow.pop %v267
  %v269 = vmul.f32 %v240, 1.442695
  %v270 = vpow.pop %v269
  %v271 = vmul.f32 %v241, 1.442695
  %v272 = vpow.pop %v271
  %v273 = vmul.f32 %v242, 1.442695
  %v274 = vpow.pop %v273
  %275 = vadd.xlane.f32.xlu0 %v244
  %v276 = vpop.xlane.xlu0 %275
  %277 = vadd.xlane.f32.xlu0 %v246
  %v278 = vpop.xlane.xlu0 %277
  %279 = vadd.xlane.f32.xlu0 %v248
  %v280 = vpop.xlane.xlu0 %279
  %281 = vadd.xlane.f32.xlu0 %v250
  %v282 = vpop.xlane.xlu0 %281
  %283 = vadd.xlane.f32.xlu0 %v252
  %v284 = vpop.xlane.xlu0 %283
  %285 = vadd.xlane.f32.xlu0 %v254
  %v286 = vpop.xlane.xlu0 %285
  %287 = vadd.xlane.f32.xlu0 %v256
  %v288 = vpop.xlane.xlu0 %287
  %289 = vadd.xlane.f32.xlu0 %v258
  %v290 = vpop.xlane.xlu0 %289
  %291 = vadd.xlane.f32.xlu0 %v260
  %v292 = vpop.xlane.xlu0 %291
  %293 = vadd.xlane.f32.xlu0 %v262
  %v294 = vpop.xlane.xlu0 %293
  %295 = vadd.xlane.f32.xlu0 %v264
  %v296 = vpop.xlane.xlu0 %295
  %297 = vadd.xlane.f32.xlu0 %v266
  %v298 = vpop.xlane.xlu0 %297
  %299 = vadd.xlane.f32.xlu0 %v268
  %v300 = vpop.xlane.xlu0 %299
  %301 = vadd.xlane.f32.xlu0 %v270
  %v302 = vpop.xlane.xlu0 %301
  %303 = vadd.xlane.f32.xlu0 %v272
  %v304 = vpop.xlane.xlu0 %303
  %305 = vadd.xlane.f32.xlu0 %v274
  %v306 = vpop.xlane.xlu0 %305
  %v307 = vlog2.pop %v276
  %v308 = vmul.f32 %v307, 0.6931472
  %v309 = vlog2.pop %v278
  %v310 = vmul.f32 %v309, 0.6931472
  %v311 = vlog2.pop %v280
  %v312 = vmul.f32 %v311, 0.6931472
  %v313 = vlog2.pop %v282
  %v314 = vmul.f32 %v313, 0.6931472
  %v315 = vlog2.pop %v284
  %v316 = vmul.f32 %v315, 0.6931472
  %v317 = vlog2.pop %v286
  %v318 = vmul.f32 %v317, 0.6931472
  %v319 = vlog2.pop %v288
  %v320 = vmul.f32 %v319, 0.6931472
  %v321 = vlog2.pop %v290
  %v322 = vmul.f32 %v321, 0.6931472
  %v323 = vlog2.pop %v292
  %v324 = vmul.f32 %v323, 0.6931472
  %v325 = vlog2.pop %v294
  %v326 = vmul.f32 %v325, 0.6931472
  %v327 = vlog2.pop %v296
  %v328 = vmul.f32 %v327, 0.6931472
  %v329 = vlog2.pop %v298
  %v330 = vmul.f32 %v329, 0.6931472
  %v331 = vlog2.pop %v300
  %v332 = vmul.f32 %v331, 0.6931472
  %v333 = vlog2.pop %v302
  %v334 = vmul.f32 %v333, 0.6931472
  %v335 = vlog2.pop %v304
  %v336 = vmul.f32 %v335, 0.6931472
  %v337 = vlog2.pop %v306
  %v338 = vmul.f32 %v337, 0.6931472
  %v339 = vsub.f32 %v227, %v308
  %v340 = vsub.f32 %v228, %v310
  %v341 = vsub.f32 %v229, %v312
  %v342 = vsub.f32 %v230, %v314
  %v343 = vsub.f32 %v231, %v316
  %v344 = vsub.f32 %v232, %v318
  %v345 = vsub.f32 %v233, %v320
  %v346 = vsub.f32 %v234, %v322
  %v347 = vsub.f32 %v235, %v324
  %v348 = vsub.f32 %v236, %v326
  %v349 = vsub.f32 %v237, %v328
  %v350 = vsub.f32 %v238, %v330
  %v351 = vsub.f32 %v239, %v332
  %v352 = vsub.f32 %v240, %v334
  %v353 = vsub.f32 %v241, %v336
  %v354 = vsub.f32 %v242, %v338
  %355 = vst [vmem:[%s3] sm:$0xff] %v339
  %356 = vst [vmem:[%s3 + $0x8] sm:$0xff] %v340
  %357 = vst [vmem:[%s3 + $0x10] sm:$0xff] %v341
  %358 = vst [vmem:[%s3 + $0x18] sm:$0xff] %v342
  %359 = vst [vmem:[%s3 + $0x20] sm:$0xff] %v343
  %360 = vst [vmem:[%s3 + $0x28] sm:$0xff] %v344
  %361 = vst [vmem:[%s3 + $0x30] sm:$0xff] %v345
  %362 = vst [vmem:[%s3 + $0x38] sm:$0xff] %v346
  %363 = vst [vmem:[%s3 + $0x40] sm:$0xff] %v347
  %364 = vst [vmem:[%s3 + $0x48] sm:$0xff] %v348
  %365 = vst [vmem:[%s3 + $0x50] sm:$0xff] %v349
  %366 = vst [vmem:[%s3 + $0x58] sm:$0xff] %v350
  %367 = vst [vmem:[%s3 + $0x60] sm:$0xff] %v351
  %368 = vst [vmem:[%s3 + $0x68] sm:$0xff] %v352
  %369 = vst [vmem:[%s3 + $0x70] sm:$0xff] %v353
  %370 = vst [vmem:[%s3 + $0x78] sm:$0xff] %v354
  // Predicated region
  $region14: #{gcn_forward.3} parent=0 // pred_check
    _
  $region15: #{gcn_forward.3} parent=0 // pred_check_branch
    %372 = sbr.rel (0) target = $region17
  $region16: #{gcn_forward.3} parent=0 // pred_region
    _
  $region17: #{gcn_forward.3} parent=0 // pred_fallthru
    _
  // Predicated region
  $region18: #{gcn_forward.3} parent=0 // pred_check
    _
  $region19: #{gcn_forward.3} parent=0 // pred_check_branch
    %374 = sbr.rel (0) target = $region21
  $region20: #{gcn_forward.3} parent=0 // pred_region
    _
  $region21: #{gcn_forward.3} parent=0 // pred_fallthru
    _

</llo_original>
